<compile_context>
chip_gen: v5e
topology: v5e:2x2
jax: 0.10.0
libtpu: 0.0.40
codegen_flags: <defaults>
</compile_context>

<pallas_src>
import functools
import math

import jax
import jax.numpy as jnp
from jax.experimental import pallas as pl
from jax.experimental.pallas import tpu as pltpu


def _round_up(v, m):
    return ((v + m - 1) // m) * m


def _agg_kernel(x_ref, w_ref, b_ref, o_ref, acc_ref, *,
                hidden, tile_n, n_rows, mask_tail):
    # Grid: (split, row-tile). Axis 0 is "parallel" (megacore), axis 1 is the
    # reduction over row tiles within a split ("arbitrary").
    i = pl.program_id(1)

    @pl.when(i == 0)
    def _():
        acc_ref[...] = jnp.zeros_like(acc_ref)

    # One fused matmul for both linears: (tile_n, D) @ (D, 2H) -> f32.
    y = jnp.dot(x_ref[...], w_ref[...],
                preferred_element_type=jnp.float32) + b_ref[...]
    fc = y[:, :hidden]
    gate = jax.nn.sigmoid(y[:, hidden:])          # EUP
    prod = fc * gate                              # (tile_n, H) f32, VPU

    if mask_tail:
        # Zero rows that came from wrapper-side padding.
        p = pl.program_id(0)
        start = (p * pl.num_programs(1) + i) * tile_n
        row = start + jax.lax.broadcasted_iota(jnp.int32, (tile_n, 1), 0)
        prod = jnp.where(row < n_rows, prod, 0.0)

    # Accumulate 8-row group partials: pure VPU vreg adds every step; the
    # cross-sublane collapse to a single row is deferred to the wrapper.
    acc_ref[...] += jnp.sum(prod.reshape(tile_n // 8, 8, hidden), axis=0)

    @pl.when(i == pl.num_programs(1) - 1)
    def _():
        o_ref[...] = acc_ref[...].astype(o_ref.dtype)


def aggregation_block(x, w_fc, b_fc, w_gate, b_gate, *,
                      tile_n=None, num_splits=None, stream_dtype=None):
    """x: (N, D); w_*: (D, H); b_*: (1, H)  ->  (1, H) float32.

    stream_dtype=jnp.bfloat16 halves HBM bytes on x / weights for large N
    (accumulation stays f32). num_splits=None auto-selects: 2 splits (v7x
    megacore) only when N exceeds a single row tile, else 1.
    """
    N, D = x.shape
    H = w_fc.shape[1]

    # Fuse the two linears: one (D, 2H) weight, one (1, 2H) bias.
    w_all = jnp.concatenate([w_fc, w_gate], axis=1)
    b_all = jnp.concatenate([b_fc, b_gate], axis=1).astype(jnp.float32)

    if stream_dtype is not None:
        x = x.astype(stream_dtype)
        w_all = w_all.astype(stream_dtype)

    is_bf16 = x.dtype == jnp.bfloat16
    sublane = 16 if is_bf16 else 8       # sublane packing for the row tile
    cap = 1024 if is_bf16 else 512       # VMEM-safe row-tile cap (also v7x ok)

    if num_splits is None:
        # Splitting only pays off when there is more than one tile of work
        # (megacore on v7x); otherwise it just adds grid steps + padding.
        num_splits = 2 if N > cap else 1

    rows_per_split = pl.cdiv(N, num_splits)
    if tile_n is None:
        tile_n = min(cap, _round_up(rows_per_split, sublane))
    tile_n = _round_up(tile_n, sublane)

    steps = pl.cdiv(rows_per_split, tile_n)
    padded_n = num_splits * steps * tile_n
    if padded_n != N:
        x = jnp.pad(x, ((0, padded_n - N), (0, 0)))
    mask_tail = padded_n != N

    kernel = functools.partial(_agg_kernel, hidden=H, tile_n=tile_n,
                               n_rows=N, mask_tail=mask_tail)

    partials = pl.pallas_call(
        kernel,
        out_shape=jax.ShapeDtypeStruct((num_splits * 8, H), jnp.float32),
        grid_spec=pltpu.PrefetchScalarGridSpec(
            num_scalar_prefetch=0,
            grid=(num_splits, steps),
            in_specs=[
                # x row-tile; block index = split * steps + step.
                pl.BlockSpec((tile_n, D), lambda p, i: (p * steps + i, 0)),
                # Fused weight / bias: resident across the whole grid.
                pl.BlockSpec((D, 2 * H), lambda p, i: (0, 0)),
                pl.BlockSpec((1, 2 * H), lambda p, i: (0, 0)),
            ],
            # One (8, H) partial-sum block per split (no cross-core races).
            out_specs=pl.BlockSpec((8, H), lambda p, i: (p, 0)),
            scratch_shapes=[pltpu.VMEM((8, H), jnp.float32)],
        ),
        compiler_params=pltpu.CompilerParams(
            dimension_semantics=("parallel", "arbitrary"),
            vmem_limit_bytes=32 * 1024 * 1024,
        ),
    )(x, w_all, b_all)

    # Tiny epilogue: collapse (num_splits*8, H) partials -> (1, H).
    return jnp.sum(partials, axis=0, keepdims=True)


def _reference(x, w_fc, b_fc, w_gate, b_gate):
    fc_x = x @ w_fc + b_fc
    gated_x = jax.nn.sigmoid(x @ w_gate + b_gate)
    return jnp.sum(fc_x * gated_x, axis=0, keepdims=True)


if __name__ == "__main__":
    # Small shapes consistent with the module: N nodes (ragged on purpose),
    # input_dim, hidden_dim.
    N, input_dim, hidden_dim = 20, 32, 32

    key = jax.random.PRNGKey(0)
    kx, kwf, kbf, kwg, kbg = jax.random.split(key, 5)

    x = jax.random.normal(kx, (N, input_dim), dtype=jnp.float32)

    # nn.Linear-style init; weights stored pre-transposed as (D, H).
    bound = 1.0 / math.sqrt(input_dim)
    w_fc = jax.random.uniform(kwf, (input_dim, hidden_dim),
                              minval=-bound, maxval=bound, dtype=jnp.float32)
    b_fc = jax.random.uniform(kbf, (1, hidden_dim),
                              minval=-bound, maxval=bound, dtype=jnp.float32)
    w_gate = jax.random.uniform(kwg, (input_dim, hidden_dim),
                                minval=-bound, maxval=bound, dtype=jnp.float32)
    b_gate = jax.random.uniform(kbg, (1, hidden_dim),
                                minval=-bound, maxval=bound, dtype=jnp.float32)

    # f32 path (ragged N exercises the padding + in-kernel mask; auto split=1).
    h_G = aggregation_block(x, w_fc, b_fc, w_gate, b_gate)
    h_G = jax.block_until_ready(h_G)
    ref = _reference(x, w_fc, b_fc, w_gate, b_gate)
    assert h_G.shape == (1, hidden_dim)
    assert jnp.allclose(h_G, ref, atol=1e-4, rtol=1e-4)

    # Forced 2-split path (exercises the megacore layout on any chip).
    h_split = aggregation_block(x, w_fc, b_fc, w_gate, b_gate, num_splits=2)
    h_split = jax.block_until_ready(h_split)
    assert jnp.allclose(h_split, ref, atol=1e-4, rtol=1e-4)

    # bf16-streaming path (halves HBM bytes on x for large N); compare against
    # the reference evaluated on the same bf16-quantized inputs.
    h_bf16 = aggregation_block(x, w_fc, b_fc, w_gate, b_gate,
                               stream_dtype=jnp.bfloat16)
    h_bf16 = jax.block_until_ready(h_bf16)
    ref_bf16 = _reference(x.astype(jnp.bfloat16).astype(jnp.float32),
                          w_fc.astype(jnp.bfloat16).astype(jnp.float32), b_fc,
                          w_gate.astype(jnp.bfloat16).astype(jnp.float32),
                          b_gate)
    assert jnp.allclose(h_bf16, ref_bf16, atol=2e-3, rtol=2e-3)

    print("KERNEL_OK")
</pallas_src>

<mosaic_0001>
module attributes {stable_mosaic.version = 11 : i64} {
  func.func @_agg_kernel(%arg0: i32, %arg1: i32, %arg2: memref<24x32xf32, #tpu.memory_space<vmem>>, %arg3: memref<32x64xf32, #tpu.memory_space<vmem>>, %arg4: memref<1x64xf32, #tpu.memory_space<vmem>>, %arg5: memref<8x32xf32, #tpu.memory_space<vmem>>, %arg6: memref<8x32xf32, #tpu.memory_space<vmem>>) attributes {dimension_semantics = [#tpu.dimension_semantics<parallel>, #tpu.dimension_semantics<arbitrary>], iteration_bounds = array<i64: 1, 1>, scalar_prefetch = 0 : i64, scratch_operands = 1 : i64, tpu.core_type = #tpu.core_type<tc>, window_params = [{transform_indices = @transform_0, window_bounds = array<i64: 24, 32>}, {pipeline_mode = #tpu.pipeline_mode<synchronous>, transform_indices = @transform_1, window_bounds = array<i64: 32, 64>}, {pipeline_mode = #tpu.pipeline_mode<synchronous>, transform_indices = @transform_2, window_bounds = array<i64: 1, 64>}, {transform_indices = @transform_3, window_bounds = array<i64: 8, 32>}]} {
    %c0_i32 = arith.constant 0 : i32
    %0 = arith.cmpi eq, %arg1, %c0_i32 : i32
    %1 = arith.extui %0 : i1 to i32
    %c0_i32_0 = arith.constant 0 : i32
    %2 = arith.cmpi ne, %1, %c0_i32_0 : i32
    scf.if %2 {
      %cst_15 = arith.constant 0.000000e+00 : f32
      %37 = vector.broadcast %cst_15 : f32 to vector<8x32xf32>
      %c0_16 = arith.constant 0 : index
      %c0_17 = arith.constant 0 : index
      %38 = vector.load %arg6[%c0_16, %c0_17] : memref<8x32xf32, #tpu.memory_space<vmem>>, vector<8x32xf32>
      tpu.vector_store %arg6[%c0_16, %c0_17], %37 {strides = array<i32>} : memref<8x32xf32, #tpu.memory_space<vmem>>, vector<8x32xf32>,
    } else {
    }
    %c0 = arith.constant 0 : index
    %c0_1 = arith.constant 0 : index
    %3 = vector.load %arg2[%c0, %c0_1] : memref<24x32xf32, #tpu.memory_space<vmem>>, vector<24x32xf32>
    %c0_2 = arith.constant 0 : index
    %c0_3 = arith.constant 0 : index
    %4 = vector.load %arg3[%c0_2, %c0_3] : memref<32x64xf32, #tpu.memory_space<vmem>>, vector<32x64xf32>
    %cst = arith.constant dense<0.000000e+00> : vector<24x64xf32>
    %5 = tpu.matmul %3, %4, %cst {dimension_numbers = #tpu.dot_dimension_numbers<[1], [0], [0], [1], [0, 0, 1, 1], [], []>} : vector<24x32xf32>, vector<32x64xf32>, vector<24x64xf32> -> vector<24x64xf32>
    %c0_4 = arith.constant 0 : index
    %c0_5 = arith.constant 0 : index
    %6 = vector.load %arg4[%c0_4, %c0_5] : memref<1x64xf32, #tpu.memory_space<vmem>>, vector<1x64xf32>
    %7 = vector.broadcast %6 : vector<1x64xf32> to vector<24x64xf32>
    %8 = arith.addf %5, %7 : vector<24x64xf32>
    %9 = vector.extract_strided_slice %8 {offsets = [0, 0], sizes = [24, 32], strides = [1, 1]} : vector<24x64xf32> to vector<24x32xf32>
    %10 = vector.extract_strided_slice %8 {offsets = [0, 32], sizes = [24, 32], strides = [1, 1]} : vector<24x64xf32> to vector<24x32xf32>
    %11 = arith.negf %10 : vector<24x32xf32>
    %12 = math.exp %11 : vector<24x32xf32>
    %cst_6 = arith.constant 1.000000e+00 : f32
    %13 = vector.broadcast %cst_6 : f32 to vector<24x32xf32>
    %14 = arith.addf %13, %12 : vector<24x32xf32>
    %15 = arith.divf %13, %14 : vector<24x32xf32>
    %16 = arith.mulf %9, %15 : vector<24x32xf32>
    %c1_i32 = arith.constant 1 : i32
    %17 = arith.muli %arg0, %c1_i32 : i32
    %18 = arith.addi %17, %arg1 : i32
    %c24_i32 = arith.constant 24 : i32
    %19 = arith.muli %18, %c24_i32 : i32
    %20 = tpu.iota {dimensions = array<i32: 0>} : vector<24x1xi32>
    %21 = vector.broadcast %19 : i32 to vector<24x1xi32>
    %22 = arith.addi %21, %20 : vector<24x1xi32>
    %c20_i32 = arith.constant 20 : i32
    %23 = vector.broadcast %c20_i32 : i32 to vector<24x1xi32>
    %24 = arith.cmpi slt, %22, %23 : vector<24x1xi32>
    %cst_7 = arith.constant 0.000000e+00 : f32
    %25 = vector.shape_cast %24 : vector<24x1xi1> to vector<24x1xi1>
    %26 = vector.broadcast %25 : vector<24x1xi1> to vector<24x32xi1>
    %27 = vector.broadcast %cst_7 : f32 to vector<24x32xf32>
    %28 = arith.select %26, %16, %27 : vector<24x32xi1>, vector<24x32xf32>
    %c0_8 = arith.constant 0 : index
    %c0_9 = arith.constant 0 : index
    %29 = vector.load %arg6[%c0_8, %c0_9] : memref<8x32xf32, #tpu.memory_space<vmem>>, vector<8x32xf32>
    %30 = vector.shape_cast %28 : vector<24x32xf32> to vector<3x8x32xf32>
    %cst_10 = arith.constant dense<0.000000e+00> : vector<8x32xf32>
    %31 = vector.multi_reduction <add>, %30, %cst_10 [0] : vector<3x8x32xf32> to vector<8x32xf32>
    %32 = arith.addf %29, %31 : vector<8x32xf32>
    %c0_11 = arith.constant 0 : index
    %c0_12 = arith.constant 0 : index
    %33 = vector.load %arg6[%c0_11, %c0_12] : memref<8x32xf32, #tpu.memory_space<vmem>>, vector<8x32xf32>
    tpu.vector_store %arg6[%c0_11, %c0_12], %32 {strides = array<i32>} : memref<8x32xf32, #tpu.memory_space<vmem>>, vector<8x32xf32>,
    %c0_i32_13 = arith.constant 0 : i32
    %34 = arith.cmpi eq, %arg1, %c0_i32_13 : i32
    %35 = arith.extui %34 : i1 to i32
    %c0_i32_14 = arith.constant 0 : i32
    %36 = arith.cmpi ne, %35, %c0_i32_14 : i32
    scf.if %36 {
      %c0_15 = arith.constant 0 : index
      %c0_16 = arith.constant 0 : index
      %37 = vector.load %arg6[%c0_15, %c0_16] : memref<8x32xf32, #tpu.memory_space<vmem>>, vector<8x32xf32>
      %c0_17 = arith.constant 0 : index
      %c0_18 = arith.constant 0 : index
      %38 = vector.load %arg5[%c0_17, %c0_18] : memref<8x32xf32, #tpu.memory_space<vmem>>, vector<8x32xf32>
      tpu.vector_store %arg5[%c0_17, %c0_18], %37 {strides = array<i32>} : memref<8x32xf32, #tpu.memory_space<vmem>>, vector<8x32xf32>,
    } else {
    }
    return
  }
  func.func @transform_0(%arg0: i32, %arg1: i32) -> (i32, i32) {
    %c1_i32 = arith.constant 1 : i32
    %0 = arith.muli %arg0, %c1_i32 : i32
    %1 = arith.addi %0, %arg1 : i32
    %c0_i32 = arith.constant 0 : i32
    %c0_i32_0 = arith.constant 0 : i32
    return %1, %c0_i32 : i32, i32
  }
  func.func @transform_1(%arg0: i32, %arg1: i32) -> (i32, i32) {
    %c0_i32 = arith.constant 0 : i32
    %c0_i32_0 = arith.constant 0 : i32
    %c0_i32_1 = arith.constant 0 : i32
    return %c0_i32, %c0_i32_0 : i32, i32
  }
  func.func @transform_2(%arg0: i32, %arg1: i32) -> (i32, i32) {
    %c0_i32 = arith.constant 0 : i32
    %c0_i32_0 = arith.constant 0 : i32
    %c0_i32_1 = arith.constant 0 : i32
    return %c0_i32, %c0_i32_0 : i32, i32
  }
  func.func @transform_3(%arg0: i32, %arg1: i32) -> (i32, i32) {
    %c0_i32 = arith.constant 0 : i32
    %c0_i32_0 = arith.constant 0 : i32
    return %arg0, %c0_i32 : i32, i32
  }
}

</mosaic_0001>

<llo_original>
// kernel: tpu_custom_call.1
$region0: #{tpu_custom_call.1}
  #allocation0 [shape = 'u32[]', space=smem, size = 0x4, offset = 0x4, fixed_abs, tag = 'smem constant byte address 0x4 - core index']
  #allocation1 [shape = 'u32[72,128]{1,0:T(1,128)}', space=vmem, size = 0x9000, scoped, tag = 'internal scratch']
  #allocation2 [shape = 'f32[8,32]{1,0:T(8,128)}', space=vmem, size = 0x1000, scoped, tag = 'scratch operand']
  %s0 = inlined_call_operand.hbm [shape: f32[24,32], index: 0, kind: input, shape index: {}]
  %s1 = inlined_call_operand.hbm [shape: f32[32,64], index: 1, kind: input, shape index: {}]
  %s2 = inlined_call_operand.vmem [shape: f32[1,64], index: 2, kind: input, shape index: {}]
  %s3 = inlined_call_operand.hbm [shape: f32[8,32], index: 3, kind: output, shape index: {}]
  %s4 = sld [smem:[#allocation0]]
  $region38: #{tpu_custom_call.1} parent=0
    _
  %s6 = ssub.s32 1, %s4
  %s7 = scalar_select 0, %s6, %s4
  $region1: #{tpu_custom_call.1} parent=0
    #allocation3 [shape = 'u8[12288]{0}', space=vmem, size = 0x3000, scoped, tag = 'input window, operand 0, single buffered']
    #allocation4 [shape = 's32[1]{0}', space=sflag, size = 0x4, scoped, tag = 'scoped memory for tpu_custom_call.1']
    #allocation5 [shape = 's32[1]{0}', space=sflag, size = 0x4, scoped, tag = 'scoped memory for tpu_custom_call.1']
    #allocation6 [shape = 'u8[16384]{0}', space=vmem, size = 0x4000, scoped, tag = 'input window, operand 1, single buffered']
    #allocation7 [shape = 's32[1]{0}', space=sflag, size = 0x4, scoped, tag = 'scoped memory for tpu_custom_call.1']
    #allocation8 [shape = 'u8[4096]{0}', space=vmem, size = 0x1000, scoped, tag = 'output window, operand 0, single buffered']
    %8 = vsyncpa [#allocation4], 0
    %9 = vsyncpa [#allocation7], 0
    %10 = vsyncpa [#allocation5], 0
    // Predicated region
    $region2: #{tpu_custom_call.1} parent=1 // pred_check
      _
    $region3: #{tpu_custom_call.1} parent=1 // pred_check_branch
      %12 = sbr.rel (0) target = $region5
    $region4: #{tpu_custom_call.1} parent=1 // pred_region
      %s13 = sadd.s32 0, 0
      %s14 = smul.u32 3, %s13
      %16 = vsyncadd [#allocation4], 0
      %s17 = smul.addr %s14, 8
      %s18 = scalar_lea.hbm %s0, %s17
      %s19 = sshll.u32 %s18, 4
      %s20 = int_to_ptr.hbm [resolvable:$true] %s19
      %s21 = sshll.u32 [#allocation3], 4
      %s22 = int_to_ptr.vmem [resolvable:$true] %s21
      %27 = dma.hbm_to_vmem [thread:$0]  %s20, 384, %s22, [#allocation4], 128, 128, 8
    $region5: #{tpu_custom_call.1} parent=1 // pred_fallthru
      _
    // Predicated region
    $region6: #{tpu_custom_call.1} parent=1 // pred_check
      _
    $region7: #{tpu_custom_call.1} parent=1 // pred_check_branch
      %29 = sbr.rel (0) target = $region9
    $region8: #{tpu_custom_call.1} parent=1 // pred_region
      %31 = vsyncadd [#allocation7], 0
      %s32 = sshll.u32 %s1, 4
      %s33 = int_to_ptr.hbm [resolvable:$true] %s32
      %s34 = sshll.u32 [#allocation6], 4
      %s35 = int_to_ptr.vmem [resolvable:$true] %s34
      %40 = dma.hbm_to_vmem [thread:$0]  %s33, 512, %s35, [#allocation7], 128, 128, 8
    $region9: #{tpu_custom_call.1} parent=1 // pred_fallthru
      _
    // Predicated region
    $region10: #{tpu_custom_call.1} parent=1 // pred_check
      _
    $region11: #{tpu_custom_call.1} parent=1 // pred_check_branch
      %42 = sbr.rel (0) target = $region13
    $region12: #{tpu_custom_call.1} parent=1 // pred_region
      _
    $region13: #{tpu_custom_call.1} parent=1 // pred_fallthru
      _
    // Predicated region
    $region14: #{tpu_custom_call.1} parent=1 // pred_check
      _
    $region15: #{tpu_custom_call.1} parent=1 // pred_check_branch
      %44 = sbr.rel (0) target = $region17
    $region16: #{tpu_custom_call.1} parent=1 // pred_region
      %46 = dma.done [#allocation4], 384
    $region17: #{tpu_custom_call.1} parent=1 // pred_fallthru
      _
    // Predicated region
    $region18: #{tpu_custom_call.1} parent=1 // pred_check
      _
    $region19: #{tpu_custom_call.1} parent=1 // pred_check_branch
      %48 = sbr.rel (0) target = $region21
    $region20: #{tpu_custom_call.1} parent=1 // pred_region
      %50 = dma.done [#allocation7], 512
    $region21: #{tpu_custom_call.1} parent=1 // pred_fallthru
      _
    %s51 = sadd.s32 0, 0
    %s52 = smul.u32 3, %s51
    %p53 = scmp.eq.s32.totalorder 0, 0
    // Predicated region
    $region22: #{tpu_custom_call.1} parent=1 // pred_check
      %p54 = pneg %p53
    $region23: #{tpu_custom_call.1} parent=1 // pred_check_branch
      %56 = sbr.rel (%p54) target = $region25
    $region24: #{tpu_custom_call.1} parent=1 // pred_region
      %vm57 = vcmask 261120
      %58 = vst.msk [vmem:[#allocation2] sm:$0xff] %vm57, 0.0
    $region25: #{tpu_custom_call.1} parent=1 // pred_fallthru
      _
    %v59 = vld [vmem:[#allocation3] sm:$0xff]
    %v60 = vld [vmem:[#allocation3 + $0x8] sm:$0xff]
    %v61 = vld [vmem:[#allocation3 + $0x10] sm:$0xff]
    %v62 = vld [vmem:[#allocation6] sm:$0xff]
    %v63 = vld [vmem:[#allocation6 + $0x8] sm:$0xff]
    %v64 = vld [vmem:[#allocation6 + $0x10] sm:$0xff]
    %v65 = vld [vmem:[#allocation6 + $0x18] sm:$0xff]
    %v66 = vld [vmem:[%s2] sm:$0x1]
    %v68 = vperm.slane %v66, 0
    %vm70 = vcmask 261120
    %v72 = vsel %vm70, %v59, 0
    %v75 = vsel %vm70, %v60, 0
    %v78 = vsel %vm70, %v61, 0
    %80 = vmatpush.msra.mxu0 0.0
    %81 = vmatpush.msra.mxu0 0.0
    %82 = vmatpush.msra.mxu0 0.0
    %83 = vmatpush.msra.mxu0 0.0
    %84 = vmatpush.msra.mxu0 0.0
    %85 = vmatpush.msra.mxu0 0.0
    %86 = vmatpush.msra.mxu0 0.0
    %87 = vmatpush.msra.mxu0 0.0
    %88 = vmatpush.msra.mxu0 0.0
    %89 = vmatpush.msra.mxu0 0.0
    %90 = vmatpush.msra.mxu0 0.0
    %91 = vmatpush.msra.mxu0 0.0
    %92 = vmatpush.msra.mxu0 %v65
    %93 = vmatpush.msra.mxu0 %v64
    %94 = vmatpush.msra.mxu0 %v63
    %95 = vmatpush.msra.mxu0 %v62
    %96 = vmatmul.f32.gmra.mxu0 %v72
    %v97 = vpop.f32.mrf.mxu0
    %v98 = vadd.f32 %v68, %v97
    %99 = vmatmul.f32.gmra.mxu0 %v75
    %v100 = vpop.f32.mrf.mxu0
    %v101 = vadd.f32 %v68, %v100
    %102 = vmatmul.f32.gmra.mxu0 %v78
    %v103 = vpop.f32.mrf.mxu0
    %v104 = vadd.f32 %v68, %v103
    %105 = vdwg.mxu0
    %v106 = vxor.u32 %v98, 2147483648
    %v107 = vxor.u32 %v101, 2147483648
    %v108 = vxor.u32 %v104, 2147483648
    %v109 = vmul.f32 %v106, 1.442695
    %v110 = vpow.pop %v109
    %v111 = vmul.f32 %v107, 1.442695
    %v112 = vpow.pop %v111
    %v113 = vmul.f32 %v108, 1.442695
    %v114 = vpow.pop %v113
    %v115 = vadd.f32 %v110, 1.0
    %v116 = vadd.f32 %v112, 1.0
    %v117 = vadd.f32 %v114, 1.0
    %v118 = vrcp.pop %v115
    %v119 = vmul.f32 %v115, %v118
    %v120 = vsub.f32 1.0, %v119
    %v121 = vmul.f32 %v118, %v120
    %v122 = vadd.f32 %v118, %v121
    %vm123 = vweird.f32 %v115
    %vm124 = vweird.f32 %v118
    %vm125 = vmor %vm123, %vm124
    %v126 = vsel %vm125, %v118, %v122
    %v127 = vand.u32 2147483647, %v115
    %vm128 = vcmp.eq.f32.partialorder %v127, 8.507059e+37
    %v129 = vand.u32 %v115, 2147483648
    %v130 = vor.u32 1.1754944e-38, %v129
    %v131 = vsel %vm128, %v130, %v126
    %v132 = vmul.f32 1.0, %v131
    %v133 = vrcp.pop %v116
    %v134 = vmul.f32 %v116, %v133
    %v135 = vsub.f32 1.0, %v134
    %v136 = vmul.f32 %v133, %v135
    %v137 = vadd.f32 %v133, %v136
    %vm138 = vweird.f32 %v116
    %vm139 = vweird.f32 %v133
    %vm140 = vmor %vm138, %vm139
    %v141 = vsel %vm140, %v133, %v137
    %v142 = vand.u32 2147483647, %v116
    %vm143 = vcmp.eq.f32.partialorder %v142, 8.507059e+37
    %v144 = vand.u32 %v116, 2147483648
    %v145 = vor.u32 1.1754944e-38, %v144
    %v146 = vsel %vm143, %v145, %v141
    %v147 = vmul.f32 1.0, %v146
    %v148 = vrcp.pop %v117
    %v149 = vmul.f32 %v117, %v148
    %v150 = vsub.f32 1.0, %v149
    %v151 = vmul.f32 %v148, %v150
    %v152 = vadd.f32 %v148, %v151
    %vm153 = vweird.f32 %v117
    %vm154 = vweird.f32 %v148
    %vm155 = vmor %vm153, %vm154
    %v156 = vsel %vm155, %v148, %v152
    %v157 = vand.u32 2147483647, %v117
    %vm158 = vcmp.eq.f32.partialorder %v157, 8.507059e+37
    %v159 = vand.u32 %v117, 2147483648
    %v160 = vor.u32 1.1754944e-38, %v159
    %v161 = vsel %vm158, %v160, %v156
    %v162 = vmul.f32 1.0, %v161
    %166 = vrot.lane.b32.xlu0 %v132, 96
    %v167 = vpop.permute.xlu0 %166
    %168 = vrot.lane.b32.xlu0 %v147, 96
    %v169 = vpop.permute.xlu0 %168
    %170 = vrot.lane.b32.xlu0 %v162, 96
    %v171 = vpop.permute.xlu0 %170
    %v175 = vmul.f32 %v98, %v167
    %v176 = vmul.f32 %v101, %v169
    %v177 = vmul.f32 %v104, %v171
    %s178 = sadd.s32 0, 0
    %s179 = smul.u32 %s178, 24
    %v180 = vlaneseq
    %v181 = vshrl.u32 %v180, 7
    %v182 = vadd.s32 %v181, 8
    %v183 = vadd.s32 %v181, 16
    %v184 = vstv %s179
    %v185 = vadd.s32 %v184, %v181
    %v186 = vadd.s32 %v184, %v182
    %v187 = vadd.s32 %v184, %v183
    %vm188 = vcmp.lt.s32.totalorder %v185, 20
    %vm189 = vcmp.lt.s32.totalorder %v186, 20
    %vm190 = vcmp.lt.s32.totalorder %v187, 20
    %v191 = vsel %vm188, 1, 0
    %v192 = vsel %vm189, 1, 0
    %v193 = vsel %vm190, 1, 0
    %vm194 = vcmp.eq.s32.totalorder %v191, 1
    %vm195 = vcmp.eq.s32.totalorder %v192, 1
    %vm196 = vcmp.eq.s32.totalorder %v193, 1
    %v197 = vsel %vm194, %v175, 0.0
    %v198 = vsel %vm195, %v176, 0.0
    %v199 = vsel %vm196, %v177, 0.0
    %v200 = vld [vmem:[#allocation2] sm:$0xff]
    %v201 = vsel %vm70, %v197, 0.0
    %v202 = vsel %vm70, %v198, 0.0
    %v203 = vadd.f32 %v201, %v202
    %v204 = vsel %vm70, %v199, 0.0
    %v205 = vadd.f32 %v203, %v204
    %v206 = vadd.f32 %v200, %v205
    %207 = vst.msk [vmem:[#allocation2] sm:$0xff] %vm70, %v206
    // Predicated region
    $region26: #{tpu_custom_call.1} parent=1 // pred_check
      %p208 = pneg %p53
    $region27: #{tpu_custom_call.1} parent=1 // pred_check_branch
      %210 = sbr.rel (%p208) target = $region29
    $region28: #{tpu_custom_call.1} parent=1 // pred_region
      %v211 = vld [vmem:[#allocation2] sm:$0xff]
      %212 = vst.msk [vmem:[#allocation8] sm:$0xff] %vm70, %v211
    $region29: #{tpu_custom_call.1} parent=1 // pred_fallthru
      _
    // Predicated region
    $region30: #{tpu_custom_call.1} parent=1 // pred_check
      _
    $region31: #{tpu_custom_call.1} parent=1 // pred_check_branch
      %214 = sbr.rel (0) target = $region33
    $region32: #{tpu_custom_call.1} parent=1 // pred_region
      %216 = vsyncadd [#allocation5], 0
      %s218 = sshll.u32 [#allocation8], 4
      %s219 = int_to_ptr.vmem [resolvable:$true] %s218
      %s220 = sshll.u32 %s3, 4
      %s221 = int_to_ptr.hbm [resolvable:$true] %s220
      %223 = dma.vmem_to_hbm [thread:$0]  %s219, 128, %s221, [#allocation5]
    $region33: #{tpu_custom_call.1} parent=1 // pred_fallthru
      _
    // Predicated region
    $region34: #{tpu_custom_call.1} parent=1 // pred_check
      _
    $region35: #{tpu_custom_call.1} parent=1 // pred_check_branch
      %225 = sbr.rel (0) target = $region37
    $region36: #{tpu_custom_call.1} parent=1 // pred_region
      %227 = dma.done [#allocation5], 128
    $region37: #{tpu_custom_call.1} parent=1 // pred_fallthru
      _
    %228 = vsyncpa [#allocation4], 1
    %229 = vsyncpa [#allocation7], 1
    %230 = vsyncpa [#allocation5], 1

</llo_original>
